<compile_context>
chip_gen: v7x
topology: tpu7x:2x2x1
jax: 0.10.0
libtpu: 0.0.40
codegen_flags: <defaults>
</compile_context>

<pallas_src>
import jax
import jax.numpy as jnp
from jax import lax
from jax.experimental import pallas as pl
from jax.experimental.pallas import tpu as pltpu


def _round_up(x, m):
    return ((x + m - 1) // m) * m


def _block_vmem_bytes(rows, cols, dtype):
    """VMEM footprint of a (rows, cols) block after (8*packing, 128) tiling."""
    itemsize = jnp.dtype(dtype).itemsize
    packing = max(1, 4 // itemsize)
    sub = 8 * packing
    n_tiles = pl.cdiv(rows, sub) * pl.cdiv(cols, 128)
    return n_tiles * sub * 128 * itemsize


def _make_gaussian_smearing_kernel(coeff, start, step, resolution, chunk, n_chunks):
    """All closed-over values are Python numbers (compile-time literals)."""
    coeff = float(coeff)
    start = float(start)
    step = float(step)

    def kernel(dist_ref, out_ref):
        # dist_ref: (tile, 1) f32   -- distances along the sublane (row) axis
        # out_ref : (tile, resolution)
        k = lax.broadcasted_iota(jnp.int32, (1, resolution), 1).astype(jnp.float32)
        offset_row = k * step + start                       # (1, resolution)

        def body(c, carry):
            r0 = pl.multiple_of(c * chunk, chunk)
            d = dist_ref[pl.ds(r0, chunk), :]                # (chunk, 1)
            diff = d - offset_row                            # (chunk, resolution)
            out_ref[pl.ds(r0, chunk), :] = jnp.exp(
                coeff * (diff * diff)).astype(out_ref.dtype)
            return carry

        lax.fori_loop(0, n_chunks, body, 0)

    return kernel


def gaussian_smearing(dist, *, start=0.0, stop=5.0, resolution=50, width=0.05,
                      tile_n=8192, out_dtype=jnp.float32):
    """dist: any shape -> (*dist.shape, resolution), matching the PyTorch module."""
    dist = jnp.asarray(dist)
    batch_shape = tuple(int(s) for s in dist.shape)
    n = 1
    for s in batch_shape:
        n *= s
    out_shape = (*batch_shape, resolution)
    if n == 0:
        return jnp.zeros(out_shape, out_dtype)

    coeff = -0.5 / ((stop - start) * width) ** 2
    step = (stop - start) / (resolution - 1) if resolution > 1 else 0.0

    # ---- tiling ------------------------------------------------------------
    n_eff = _round_up(n, 128)
    tile = min(max(128, _round_up(int(tile_n), 128)), n_eff)
    if n_eff >= 256:
        # v7x megacore: guarantee at least 2 grid steps when there is work.
        tile = min(tile, max(128, _round_up((n_eff + 1) // 2, 128)))
    chunk = next(c for c in (1024, 512, 256, 128) if tile % c == 0)
    n_chunks = tile // chunk
    grid_n = pl.cdiv(n, tile)

    # ---- VMEM budget (double-buffered in + out blocks, plus headroom) ------
    in_bytes = _block_vmem_bytes(tile, 1, jnp.float32)
    out_bytes = _block_vmem_bytes(tile, resolution, out_dtype)
    vmem_limit = int(min(64 * 1024 * 1024,
                         max(32 * 1024 * 1024,
                             2 * (in_bytes + out_bytes) + (8 << 20))))

    dist_col = dist.reshape(n, 1).astype(jnp.float32)   # free reshape, tiny input
    kernel = _make_gaussian_smearing_kernel(coeff, start, step, resolution,
                                            chunk, n_chunks)
    out_itemsize = jnp.dtype(out_dtype).itemsize

    out = pl.pallas_call(
        kernel,
        out_shape=jax.ShapeDtypeStruct((n, resolution), out_dtype),
        grid_spec=pltpu.PrefetchScalarGridSpec(
            num_scalar_prefetch=0,
            grid=(grid_n,),
            in_specs=[pl.BlockSpec((tile, 1), lambda i: (i, 0))],
            out_specs=pl.BlockSpec((tile, resolution), lambda i: (i, 0)),
        ),
        compiler_params=pltpu.CompilerParams(
            dimension_semantics=("parallel",),
            vmem_limit_bytes=vmem_limit,
        ),
        cost_estimate=pl.CostEstimate(
            flops=3 * n * resolution,
            transcendentals=n * resolution,
            bytes_accessed=4 * n + n * resolution * out_itemsize,
        ),
    )(dist_col)

    return out.reshape(out_shape)


def gaussian_smearing_ref(dist, *, start=0.0, stop=5.0, resolution=50, width=0.05):
    coeff = -0.5 / ((stop - start) * width) ** 2
    offset = jnp.linspace(start, stop, resolution, dtype=jnp.float32)
    d = dist[..., None] - offset
    return jnp.exp(coeff * d * d)


if __name__ == "__main__":
    key = jax.random.PRNGKey(0)
    N = 512  # small demo: tile clamps to 256 rows -> grid of 2 steps
    dist = jax.random.uniform(key, (N,), dtype=jnp.float32, minval=0.0, maxval=5.0)

    out = gaussian_smearing(dist)
    out = jax.block_until_ready(out)

    ref = gaussian_smearing_ref(dist)
    assert out.shape == (N, 50), out.shape
    assert jnp.allclose(out, ref, atol=1e-5, rtol=1e-4), "mismatch vs reference"

    print("KERNEL_OK")
</pallas_src>

<mosaic_0001>
module attributes {stable_mosaic.version = 11 : i64} {
  func.func @kernel(%arg0: i32, %arg1: memref<256x1xf32, #tpu.memory_space<vmem>>, %arg2: memref<256x50xf32, #tpu.memory_space<vmem>>) attributes {dimension_semantics = [#tpu.dimension_semantics<parallel>], iteration_bounds = array<i64: 2>, scalar_prefetch = 0 : i64, scratch_operands = 0 : i64, tpu.core_type = #tpu.core_type<tc>, window_params = [{transform_indices = @transform_0, window_bounds = array<i64: 256, 1>}, {transform_indices = @transform_1, window_bounds = array<i64: 256, 50>}]} {
    %0 = tpu.iota {dimensions = array<i32: 1>} : vector<1x50xi32>
    %1 = arith.sitofp %0 : vector<1x50xi32> to vector<1x50xf32>
    %cst = arith.constant 0.10204082 : f32
    %2 = vector.broadcast %cst : f32 to vector<1x50xf32>
    %3 = arith.mulf %1, %2 : vector<1x50xf32>
    %cst_0 = arith.constant 0.000000e+00 : f32
    %4 = vector.broadcast %cst_0 : f32 to vector<1x50xf32>
    %5 = arith.addf %3, %4 : vector<1x50xf32>
    %c0_i32 = arith.constant 0 : i32
    %c256_i32 = arith.constant 256 : i32
    %6 = arith.muli %c0_i32, %c256_i32 : i32
    %7 = tpu.assume_multiple %6, 256 : i32
    %8 = arith.index_cast %7 : i32 to index
    %c0 = arith.constant 0 : index
    %9 = vector.load %arg1[%8, %c0] : memref<256x1xf32, #tpu.memory_space<vmem>>, vector<256x1xf32>
    %10 = vector.broadcast %9 : vector<256x1xf32> to vector<256x50xf32>
    %11 = vector.broadcast %5 : vector<1x50xf32> to vector<256x50xf32>
    %12 = arith.subf %10, %11 : vector<256x50xf32>
    %13 = arith.mulf %12, %12 : vector<256x50xf32>
    %cst_1 = arith.constant -8.000000e+00 : f32
    %14 = vector.broadcast %cst_1 : f32 to vector<256x50xf32>
    %15 = arith.mulf %14, %13 : vector<256x50xf32>
    %16 = math.exp %15 : vector<256x50xf32>
    %17 = arith.index_cast %7 : i32 to index
    %c0_2 = arith.constant 0 : index
    %18 = vector.load %arg2[%17, %c0_2] : memref<256x50xf32, #tpu.memory_space<vmem>>, vector<256x50xf32>
    tpu.vector_store %arg2[%17, %c0_2], %16 {strides = array<i32>} : memref<256x50xf32, #tpu.memory_space<vmem>>, vector<256x50xf32>,
    %c1_i32 = arith.constant 1 : i32
    return
  }
  func.func @transform_0(%arg0: i32) -> (i32, i32) {
    %c0_i32 = arith.constant 0 : i32
    %c0_i32_0 = arith.constant 0 : i32
    return %arg0, %c0_i32 : i32, i32
  }
  func.func @transform_1(%arg0: i32) -> (i32, i32) {
    %c0_i32 = arith.constant 0 : i32
    %c0_i32_0 = arith.constant 0 : i32
    return %arg0, %c0_i32 : i32, i32
  }
}

</mosaic_0001>

<llo_original>
// kernel: tpu_custom_call.1
$region0: #{tpu_custom_call.1}
  #allocation0 [shape = 'u32[]', space=smem, size = 0x4, offset = 0x4, fixed_abs, tag = 'smem constant byte address 0x4 - core index']
  #allocation1 [shape = 'u32[144,128]{1,0:T(1,128)}', space=vmem, size = 0x12000, scoped, tag = 'internal scratch']
  %s0 = inlined_call_operand.vmem [shape: f32[512,1], index: 0, kind: input, shape index: {}]
  %s1 = inlined_call_operand.vmem [shape: f32[512,50], index: 1, kind: output, shape index: {}]
  %s2 = sld [smem:[#allocation0]]
  $region37: #{tpu_custom_call.1} parent=0
    _
  %s4 = ssub.s32 1, %s2
  %s5 = scalar_select 0, %s4, %s2
  loop: start=0, step=1, limit=4
  $region2: #{tpu_custom_call.1} parent=0 // loop_pre_header
    _
  $region3: #{tpu_custom_call.1} parent=0 // loop_header
    %s7 = sphi 0, %s11
    %p8 = scmp.ge.s32.totalorder %s7, 4
    %s17 = sphi 0, %s19
    %s20 = sphi 0, %s17
    %s21 = sphi 0, %s20
    %s37 = sphi 0, %s21
    %s43 = sphi 0, %s45
    %s46 = sphi 0, %s43
    %s47 = sphi 0, %s46
    %s63 = sphi 0, %s47
  $region4: #{tpu_custom_call.1} parent=0 // loop_header_branch
    %10 = sbr.rel (%p8) target = $region8
  $region5: #{tpu_custom_call.1} parent=0 // loop_body
    %s12 = ssub.s32 %s7, 1
    %s13 = ssub.s32 %s7, 2
    %s14 = sadd.s32 %s7, 1
    %s15 = ssub.s32 %s7, %s14
    %p16 = scmp.eq.s32.totalorder %s15, 0
    %s18 = sadd.s32 %s17, 1
    %s19 = scalar_select %p16, %s17, %s18
    %p22 = pneg %p16
    %p23 = scmp.eq.s32.totalorder %s7, 1
    %p24 = por %p22, %p23
    %p25 = scmp.ne.s32.totalorder %s17, %s20
    %p26 = scmp.eq.s32.totalorder %s7, 0
    %p27 = por %p25, %p26
    %p28 = scmp.ne.s32.totalorder %s17, %s20
    %p29 = scmp.eq.s32.totalorder %s12, 1
    %p30 = por %p28, %p29
    %p31 = scmp.ne.s32.totalorder %s20, %s21
    %p32 = scmp.eq.s32.totalorder %s12, 0
    %p33 = por %p31, %p32
    %p34 = scmp.ne.s32.totalorder %s20, %s21
    %p35 = scmp.eq.s32.totalorder %s13, 1
    %p36 = por %p34, %p35
    %p38 = scmp.ne.s32.totalorder %s21, %s37
    %p39 = scmp.eq.s32.totalorder %s13, 0
    %p40 = por %p38, %p39
    %s41 = ssub.s32 %s7, %s14
    %p42 = scmp.eq.s32.totalorder %s41, 0
    %s44 = sadd.s32 %s43, 1
    %s45 = scalar_select %p42, %s43, %s44
    %p48 = pneg %p42
    %p49 = scmp.eq.s32.totalorder %s7, 1
    %p50 = por %p48, %p49
    %p51 = scmp.ne.s32.totalorder %s43, %s46
    %p52 = scmp.eq.s32.totalorder %s7, 0
    %p53 = por %p51, %p52
    %p54 = scmp.ne.s32.totalorder %s43, %s46
    %p55 = scmp.eq.s32.totalorder %s12, 1
    %p56 = por %p54, %p55
    %p57 = scmp.ne.s32.totalorder %s46, %s47
    %p58 = scmp.eq.s32.totalorder %s12, 0
    %p59 = por %p57, %p58
    %p60 = scmp.ne.s32.totalorder %s46, %s47
    %p61 = scmp.eq.s32.totalorder %s13, 1
    %p62 = por %p60, %p61
    %p64 = scmp.ne.s32.totalorder %s47, %s63
    %p65 = scmp.eq.s32.totalorder %s13, 0
    %p66 = por %p64, %p65
    %p67 = scmp.le.s32.totalorder 1, %s7
    %p68 = scmp.lt.s32.totalorder %s7, 3
    %p69 = pnand %p67, %p68
    %p70 = pneg %p69
    // Predicated region
    $region9: #{tpu_custom_call.1} parent=5 // pred_check
      _
    $region10: #{tpu_custom_call.1} parent=5 // pred_check_branch
      %72 = sbr.rel (%p69) target = $region12
    $region11: #{tpu_custom_call.1} parent=5 // pred_region
      %s73 = ssub.s32 %s7, 1
    $region12: #{tpu_custom_call.1} parent=5 // pred_fallthru
      _
    %p74 = scmp.lt.s32.totalorder %s7, 2
    // Predicated region
    $region13: #{tpu_custom_call.1} parent=5 // pred_check
      %p75 = pneg %p74
    $region14: #{tpu_custom_call.1} parent=5 // pred_check_branch
      %77 = sbr.rel (%p75) target = $region16
    $region15: #{tpu_custom_call.1} parent=5 // pred_region
      // Predicated region
      $region17: #{tpu_custom_call.1} parent=15 // pred_check
        %p78 = pneg %p27
      $region18: #{tpu_custom_call.1} parent=15 // pred_check_branch
        %80 = sbr.rel (%p78) target = $region20
      $region19: #{tpu_custom_call.1} parent=15 // pred_region
        %s81 = smul.u32 32, %s7
        %p82 = scmp.lt.s32.totalorder %s81, 63
        %s83 = scalar_select %p82, %s81, 63
        %s84 = smul.addr %s83, 8
        %s85 = scalar_lea.vmem %s0, %s84
        %s86 = smul.u32 32, %s7
      $region20: #{tpu_custom_call.1} parent=15 // pred_fallthru
        _
    $region16: #{tpu_custom_call.1} parent=5 // pred_fallthru
      _
    %p87 = scmp.le.s32.totalorder 1, %s7
    %p88 = scmp.lt.s32.totalorder %s7, 3
    %p89 = pnand %p87, %p88
    %p90 = pneg %p89
    // Predicated region
    $region21: #{tpu_custom_call.1} parent=5 // pred_check
      _
    $region22: #{tpu_custom_call.1} parent=5 // pred_check_branch
      %92 = sbr.rel (%p89) target = $region24
    $region23: #{tpu_custom_call.1} parent=5 // pred_region
      %s93 = ssub.s32 %s7, 1
      %s94 = smul.u32 32, %s12
      %p95 = scmp.lt.s32.totalorder %s94, 63
      %s96 = scalar_select %p95, %s94, 63
      %s97 = smul.addr %s96, 8
      %s98 = scalar_lea.vmem %s0, %s97
      %p99 = pneg %p33
      %p100 = pneg %p30
      %p101 = pneg %p59
      %p102 = pneg %p56
      %s103 = smul.u32 32, %s12
      %p104 = scmp.lt.s32.totalorder %s103, 63
      %s105 = scalar_select %p104, %s103, 63
      %s106 = smul.addr %s105, 8
      %s107 = scalar_lea.vmem %s1, %s106
      %s108 = smul.u32 32, %s12
      %p109 = scmp.lt.s32.totalorder %s108, 63
      %s110 = scalar_select %p109, %s108, 63
      %s111 = smul.addr %s110, 8
      %s112 = scalar_lea.vmem %s0, %s111
      %s113 = smul.u32 32, %s12
      %s114 = smul.u32 32, %s12
      %p115 = scmp.lt.s32.totalorder %s114, 63
      %s116 = scalar_select %p115, %s114, 63
      %s117 = smul.addr %s116, 8
      %s118 = scalar_lea.vmem %s1, %s117
      %s119 = smul.u32 32, %s12
      %v120 = vlaneseq
      %v121 = vand.u32 %v120, 127
      %v122 = vcvt.s32.f32 %v121
      %v123 = vmul.f32 %v122, 0.10204082
      %v124 = vadd.f32 %v123, 0.0
      %v125 = vld [vmem:[%s112] sm:$0xff]
      %v126 = vld [vmem:[%s112 + $0x8] sm:$0xff]
      %v127 = vld [vmem:[%s112 + $0x10] sm:$0xff]
      %v128 = vld [vmem:[%s112 + $0x18] sm:$0xff]
      %v129 = vld [vmem:[%s112 + $0x20] sm:$0xff]
      %v130 = vld [vmem:[%s112 + $0x28] sm:$0xff]
      %v131 = vld [vmem:[%s112 + $0x30] sm:$0xff]
      %v132 = vld [vmem:[%s112 + $0x38] sm:$0xff]
      %v133 = vld [vmem:[%s112 + $0x40] sm:$0xff]
      %v134 = vld [vmem:[%s112 + $0x48] sm:$0xff]
      %v135 = vld [vmem:[%s112 + $0x50] sm:$0xff]
      %v136 = vld [vmem:[%s112 + $0x58] sm:$0xff]
      %v137 = vld [vmem:[%s112 + $0x60] sm:$0xff]
      %v138 = vld [vmem:[%s112 + $0x68] sm:$0xff]
      %v139 = vld [vmem:[%s112 + $0x70] sm:$0xff]
      %v140 = vld [vmem:[%s112 + $0x78] sm:$0xff]
      %v141 = vld [vmem:[%s112 + $0x80] sm:$0xff]
      %v142 = vld [vmem:[%s112 + $0x88] sm:$0xff]
      %v143 = vld [vmem:[%s112 + $0x90] sm:$0xff]
      %v144 = vld [vmem:[%s112 + $0x98] sm:$0xff]
      %v145 = vld [vmem:[%s112 + $0xa0] sm:$0xff]
      %v146 = vld [vmem:[%s112 + $0xa8] sm:$0xff]
      %v147 = vld [vmem:[%s112 + $0xb0] sm:$0xff]
      %v148 = vld [vmem:[%s112 + $0xb8] sm:$0xff]
      %v149 = vld [vmem:[%s112 + $0xc0] sm:$0xff]
      %v150 = vld [vmem:[%s112 + $0xc8] sm:$0xff]
      %v151 = vld [vmem:[%s112 + $0xd0] sm:$0xff]
      %v152 = vld [vmem:[%s112 + $0xd8] sm:$0xff]
      %v153 = vld [vmem:[%s112 + $0xe0] sm:$0xff]
      %v154 = vld [vmem:[%s112 + $0xe8] sm:$0xff]
      %v155 = vld [vmem:[%s112 + $0xf0] sm:$0xff]
      %v156 = vld [vmem:[%s112 + $0xf8] sm:$0xff]
      %158 = vset.pattern.permute.xlu0 0
      %159 = vperm.xlu0 %158, %v125
      %v160 = vpop.permute.xlu0 %159
      %163 = vset.pattern.permute.xlu0 0
      %164 = vperm.xlu0 %163, %v126
      %v165 = vpop.permute.xlu0 %164
      %168 = vset.pattern.permute.xlu0 0
      %169 = vperm.xlu0 %168, %v127
      %v170 = vpop.permute.xlu0 %169
      %173 = vset.pattern.permute.xlu0 0
      %174 = vperm.xlu0 %173, %v128
      %v175 = vpop.permute.xlu0 %174
      %178 = vset.pattern.permute.xlu0 0
      %179 = vperm.xlu0 %178, %v129
      %v180 = vpop.permute.xlu0 %179
      %183 = vset.pattern.permute.xlu0 0
      %184 = vperm.xlu0 %183, %v130
      %v185 = vpop.permute.xlu0 %184
      %188 = vset.pattern.permute.xlu0 0
      %189 = vperm.xlu0 %188, %v131
      %v190 = vpop.permute.xlu0 %189
      %193 = vset.pattern.permute.xlu0 0
      %194 = vperm.xlu0 %193, %v132
      %v195 = vpop.permute.xlu0 %194
      %198 = vset.pattern.permute.xlu0 0
      %199 = vperm.xlu0 %198, %v133
      %v200 = vpop.permute.xlu0 %199
      %203 = vset.pattern.permute.xlu0 0
      %204 = vperm.xlu0 %203, %v134
      %v205 = vpop.permute.xlu0 %204
      %208 = vset.pattern.permute.xlu0 0
      %209 = vperm.xlu0 %208, %v135
      %v210 = vpop.permute.xlu0 %209
      %213 = vset.pattern.permute.xlu0 0
      %214 = vperm.xlu0 %213, %v136
      %v215 = vpop.permute.xlu0 %214
      %218 = vset.pattern.permute.xlu0 0
      %219 = vperm.xlu0 %218, %v137
      %v220 = vpop.permute.xlu0 %219
      %223 = vset.pattern.permute.xlu0 0
      %224 = vperm.xlu0 %223, %v138
      %v225 = vpop.permute.xlu0 %224
      %228 = vset.pattern.permute.xlu0 0
      %229 = vperm.xlu0 %228, %v139
      %v230 = vpop.permute.xlu0 %229
      %233 = vset.pattern.permute.xlu0 0
      %234 = vperm.xlu0 %233, %v140
      %v235 = vpop.permute.xlu0 %234
      %238 = vset.pattern.permute.xlu0 0
      %239 = vperm.xlu0 %238, %v141
      %v240 = vpop.permute.xlu0 %239
      %243 = vset.pattern.permute.xlu0 0
      %244 = vperm.xlu0 %243, %v142
      %v245 = vpop.permute.xlu0 %244
      %248 = vset.pattern.permute.xlu0 0
      %249 = vperm.xlu0 %248, %v143
      %v250 = vpop.permute.xlu0 %249
      %253 = vset.pattern.permute.xlu0 0
      %254 = vperm.xlu0 %253, %v144
      %v255 = vpop.permute.xlu0 %254
      %258 = vset.pattern.permute.xlu0 0
      %259 = vperm.xlu0 %258, %v145
      %v260 = vpop.permute.xlu0 %259
      %263 = vset.pattern.permute.xlu0 0
      %264 = vperm.xlu0 %263, %v146
      %v265 = vpop.permute.xlu0 %264
      %268 = vset.pattern.permute.xlu0 0
      %269 = vperm.xlu0 %268, %v147
      %v270 = vpop.permute.xlu0 %269
      %273 = vset.pattern.permute.xlu0 0
      %274 = vperm.xlu0 %273, %v148
      %v275 = vpop.permute.xlu0 %274
      %278 = vset.pattern.permute.xlu0 0
      %279 = vperm.xlu0 %278, %v149
      %v280 = vpop.permute.xlu0 %279
      %283 = vset.pattern.permute.xlu0 0
      %284 = vperm.xlu0 %283, %v150
      %v285 = vpop.permute.xlu0 %284
      %288 = vset.pattern.permute.xlu0 0
      %289 = vperm.xlu0 %288, %v151
      %v290 = vpop.permute.xlu0 %289
      %293 = vset.pattern.permute.xlu0 0
      %294 = vperm.xlu0 %293, %v152
      %v295 = vpop.permute.xlu0 %294
      %298 = vset.pattern.permute.xlu0 0
      %299 = vperm.xlu0 %298, %v153
      %v300 = vpop.permute.xlu0 %299
      %303 = vset.pattern.permute.xlu0 0
      %304 = vperm.xlu0 %303, %v154
      %v305 = vpop.permute.xlu0 %304
      %308 = vset.pattern.permute.xlu0 0
      %309 = vperm.xlu0 %308, %v155
      %v310 = vpop.permute.xlu0 %309
      %313 = vset.pattern.permute.xlu0 0
      %314 = vperm.xlu0 %313, %v156
      %v315 = vpop.permute.xlu0 %314
      %v317 = vsub.f32 %v160, %v124
      %v318 = vsub.f32 %v165, %v124
      %v319 = vsub.f32 %v170, %v124
      %v320 = vsub.f32 %v175, %v124
      %v321 = vsub.f32 %v180, %v124
      %v322 = vsub.f32 %v185, %v124
      %v323 = vsub.f32 %v190, %v124
      %v324 = vsub.f32 %v195, %v124
      %v325 = vsub.f32 %v200, %v124
      %v326 = vsub.f32 %v205, %v124
      %v327 = vsub.f32 %v210, %v124
      %v328 = vsub.f32 %v215, %v124
      %v329 = vsub.f32 %v220, %v124
      %v330 = vsub.f32 %v225, %v124
      %v331 = vsub.f32 %v230, %v124
      %v332 = vsub.f32 %v235, %v124
      %v333 = vsub.f32 %v240, %v124
      %v334 = vsub.f32 %v245, %v124
      %v335 = vsub.f32 %v250, %v124
      %v336 = vsub.f32 %v255, %v124
      %v337 = vsub.f32 %v260, %v124
      %v338 = vsub.f32 %v265, %v124
      %v339 = vsub.f32 %v270, %v124
      %v340 = vsub.f32 %v275, %v124
      %v341 = vsub.f32 %v280, %v124
      %v342 = vsub.f32 %v285, %v124
      %v343 = vsub.f32 %v290, %v124
      %v344 = vsub.f32 %v295, %v124
      %v345 = vsub.f32 %v300, %v124
      %v346 = vsub.f32 %v305, %v124
      %v347 = vsub.f32 %v310, %v124
      %v348 = vsub.f32 %v315, %v124
      %v349 = vmul.f32 %v317, %v317
      %v350 = vmul.f32 %v318, %v318
      %v351 = vmul.f32 %v319, %v319
      %v352 = vmul.f32 %v320, %v320
      %v353 = vmul.f32 %v321, %v321
      %v354 = vmul.f32 %v322, %v322
      %v355 = vmul.f32 %v323, %v323
      %v356 = vmul.f32 %v324, %v324
      %v357 = vmul.f32 %v325, %v325
      %v358 = vmul.f32 %v326, %v326
      %v359 = vmul.f32 %v327, %v327
      %v360 = vmul.f32 %v328, %v328
      %v361 = vmul.f32 %v329, %v329
      %v362 = vmul.f32 %v330, %v330
      %v363 = vmul.f32 %v331, %v331
      %v364 = vmul.f32 %v332, %v332
      %v365 = vmul.f32 %v333, %v333
      %v366 = vmul.f32 %v334, %v334
      %v367 = vmul.f32 %v335, %v335
      %v368 = vmul.f32 %v336, %v336
      %v369 = vmul.f32 %v337, %v337
      %v370 = vmul.f32 %v338, %v338
      %v371 = vmul.f32 %v339, %v339
      %v372 = vmul.f32 %v340, %v340
      %v373 = vmul.f32 %v341, %v341
      %v374 = vmul.f32 %v342, %v342
      %v375 = vmul.f32 %v343, %v343
      %v376 = vmul.f32 %v344, %v344
      %v377 = vmul.f32 %v345, %v345
      %v378 = vmul.f32 %v346, %v346
      %v379 = vmul.f32 %v347, %v347
      %v380 = vmul.f32 %v348, %v348
      %v381 = vmul.f32 %v349, -8.0
      %v382 = vmul.f32 %v350, -8.0
      %v383 = vmul.f32 %v351, -8.0
      %v384 = vmul.f32 %v352, -8.0
      %v385 = vmul.f32 %v353, -8.0
      %v386 = vmul.f32 %v354, -8.0
      %v387 = vmul.f32 %v355, -8.0
      %v388 = vmul.f32 %v356, -8.0
      %v389 = vmul.f32 %v357, -8.0
      %v390 = vmul.f32 %v358, -8.0
      %v391 = vmul.f32 %v359, -8.0
      %v392 = vmul.f32 %v360, -8.0
      %v393 = vmul.f32 %v361, -8.0
      %v394 = vmul.f32 %v362, -8.0
      %v395 = vmul.f32 %v363, -8.0
      %v396 = vmul.f32 %v364, -8.0
      %v397 = vmul.f32 %v365, -8.0
      %v398 = vmul.f32 %v366, -8.0
      %v399 = vmul.f32 %v367, -8.0
      %v400 = vmul.f32 %v368, -8.0
      %v401 = vmul.f32 %v369, -8.0
      %v402 = vmul.f32 %v370, -8.0
      %v403 = vmul.f32 %v371, -8.0
      %v404 = vmul.f32 %v372, -8.0
      %v405 = vmul.f32 %v373, -8.0
      %v406 = vmul.f32 %v374, -8.0
      %v407 = vmul.f32 %v375, -8.0
      %v408 = vmul.f32 %v376, -8.0
      %v409 = vmul.f32 %v377, -8.0
      %v410 = vmul.f32 %v378, -8.0
      %v411 = vmul.f32 %v379, -8.0
      %v412 = vmul.f32 %v380, -8.0
      %v413 = vmul.f32 %v381, 1.442695
      %v414 = vpow.pop %v413
      %v415 = vmul.f32 %v382, 1.442695
      %v416 = vpow.pop %v415
      %v417 = vmul.f32 %v383, 1.442695
      %v418 = vpow.pop %v417
      %v419 = vmul.f32 %v384, 1.442695
      %v420 = vpow.pop %v419
      %v421 = vmul.f32 %v385, 1.442695
      %v422 = vpow.pop %v421
      %v423 = vmul.f32 %v386, 1.442695
      %v424 = vpow.pop %v423
      %v425 = vmul.f32 %v387, 1.442695
      %v426 = vpow.pop %v425
      %v427 = vmul.f32 %v388, 1.442695
      %v428 = vpow.pop %v427
      %v429 = vmul.f32 %v389, 1.442695
      %v430 = vpow.pop %v429
      %v431 = vmul.f32 %v390, 1.442695
      %v432 = vpow.pop %v431
      %v433 = vmul.f32 %v391, 1.442695
      %v434 = vpow.pop %v433
      %v435 = vmul.f32 %v392, 1.442695
      %v436 = vpow.pop %v435
      %v437 = vmul.f32 %v393, 1.442695
      %v438 = vpow.pop %v437
      %v439 = vmul.f32 %v394, 1.442695
      %v440 = vpow.pop %v439
      %v441 = vmul.f32 %v395, 1.442695
      %v442 = vpow.pop %v441
      %v443 = vmul.f32 %v396, 1.442695
      %v444 = vpow.pop %v443
      %v445 = vmul.f32 %v397, 1.442695
      %v446 = vpow.pop %v445
      %v447 = vmul.f32 %v398, 1.442695
      %v448 = vpow.pop %v447
      %v449 = vmul.f32 %v399, 1.442695
      %v450 = vpow.pop %v449
      %v451 = vmul.f32 %v400, 1.442695
      %v452 = vpow.pop %v451
      %v453 = vmul.f32 %v401, 1.442695
      %v454 = vpow.pop %v453
      %v455 = vmul.f32 %v402, 1.442695
      %v456 = vpow.pop %v455
      %v457 = vmul.f32 %v403, 1.442695
      %v458 = vpow.pop %v457
      %v459 = vmul.f32 %v404, 1.442695
      %v460 = vpow.pop %v459
      %v461 = vmul.f32 %v405, 1.442695
      %v462 = vpow.pop %v461
      %v463 = vmul.f32 %v406, 1.442695
      %v464 = vpow.pop %v463
      %v465 = vmul.f32 %v407, 1.442695
      %v466 = vpow.pop %v465
      %v467 = vmul.f32 %v408, 1.442695
      %v468 = vpow.pop %v467
      %v469 = vmul.f32 %v409, 1.442695
      %v470 = vpow.pop %v469
      %v471 = vmul.f32 %v410, 1.442695
      %v472 = vpow.pop %v471
      %v473 = vmul.f32 %v411, 1.442695
      %v474 = vpow.pop %v473
      %v475 = vmul.f32 %v412, 1.442695
      %v476 = vpow.pop %v475
      %vm477 = vcmask 408576
      %478 = vst.msk [vmem:[%s118] sm:$0xff] %vm477, %v414
      %479 = vst.msk [vmem:[%s118 + $0x8] sm:$0xff] %vm477, %v416
      %480 = vst.msk [vmem:[%s118 + $0x10] sm:$0xff] %vm477, %v418
      %481 = vst.msk [vmem:[%s118 + $0x18] sm:$0xff] %vm477, %v420
      %482 = vst.msk [vmem:[%s118 + $0x20] sm:$0xff] %vm477, %v422
      %483 = vst.msk [vmem:[%s118 + $0x28] sm:$0xff] %vm477, %v424
      %484 = vst.msk [vmem:[%s118 + $0x30] sm:$0xff] %vm477, %v426
      %485 = vst.msk [vmem:[%s118 + $0x38] sm:$0xff] %vm477, %v428
      %486 = vst.msk [vmem:[%s118 + $0x40] sm:$0xff] %vm477, %v430
      %487 = vst.msk [vmem:[%s118 + $0x48] sm:$0xff] %vm477, %v432
      %488 = vst.msk [vmem:[%s118 + $0x50] sm:$0xff] %vm477, %v434
      %489 = vst.msk [vmem:[%s118 + $0x58] sm:$0xff] %vm477, %v436
      %490 = vst.msk [vmem:[%s118 + $0x60] sm:$0xff] %vm477, %v438
      %491 = vst.msk [vmem:[%s118 + $0x68] sm:$0xff] %vm477, %v440
      %492 = vst.msk [vmem:[%s118 + $0x70] sm:$0xff] %vm477, %v442
      %493 = vst.msk [vmem:[%s118 + $0x78] sm:$0xff] %vm477, %v444
      %494 = vst.msk [vmem:[%s118 + $0x80] sm:$0xff] %vm477, %v446
      %495 = vst.msk [vmem:[%s118 + $0x88] sm:$0xff] %vm477, %v448
      %496 = vst.msk [vmem:[%s118 + $0x90] sm:$0xff] %vm477, %v450
      %497 = vst.msk [vmem:[%s118 + $0x98] sm:$0xff] %vm477, %v452
      %498 = vst.msk [vmem:[%s118 + $0xa0] sm:$0xff] %vm477, %v454
      %499 = vst.msk [vmem:[%s118 + $0xa8] sm:$0xff] %vm477, %v456
      %500 = vst.msk [vmem:[%s118 + $0xb0] sm:$0xff] %vm477, %v458
      %501 = vst.msk [vmem:[%s118 + $0xb8] sm:$0xff] %vm477, %v460
      %502 = vst.msk [vmem:[%s118 + $0xc0] sm:$0xff] %vm477, %v462
      %503 = vst.msk [vmem:[%s118 + $0xc8] sm:$0xff] %vm477, %v464
      %504 = vst.msk [vmem:[%s118 + $0xd0] sm:$0xff] %vm477, %v466
      %505 = vst.msk [vmem:[%s118 + $0xd8] sm:$0xff] %vm477, %v468
      %506 = vst.msk [vmem:[%s118 + $0xe0] sm:$0xff] %vm477, %v470
      %507 = vst.msk [vmem:[%s118 + $0xe8] sm:$0xff] %vm477, %v472
      %508 = vst.msk [vmem:[%s118 + $0xf0] sm:$0xff] %vm477, %v474
      %509 = vst.msk [vmem:[%s118 + $0xf8] sm:$0xff] %vm477, %v476
      %s510 = smul.u32 32, %s12
      %p511 = scmp.lt.s32.totalorder %s510, 63
      %s512 = scalar_select %p511, %s510, 63
      %s513 = smul.addr %s512, 8
      %s514 = scalar_lea.vmem %s1, %s513
      // Predicated region
      $region25: #{tpu_custom_call.1} parent=23 // pred_check
        %p515 = pneg %p56
      $region26: #{tpu_custom_call.1} parent=23 // pred_check_branch
        %517 = sbr.rel (%p515) target = $region28
      $region27: #{tpu_custom_call.1} parent=23 // pred_region
        %s518 = smul.u32 32, %s12
      $region28: #{tpu_custom_call.1} parent=23 // pred_fallthru
        _
    $region24: #{tpu_custom_call.1} parent=5 // pred_fallthru
      _
    %p519 = scmp.le.s32.totalorder 2, %s7
    // Predicated region
    $region29: #{tpu_custom_call.1} parent=5 // pred_check
      %p520 = pneg %p519
    $region30: #{tpu_custom_call.1} parent=5 // pred_check_branch
      %522 = sbr.rel (%p520) target = $region32
    $region31: #{tpu_custom_call.1} parent=5 // pred_region
      %s523 = ssub.s32 %s7, 2
      // Predicated region
      $region33: #{tpu_custom_call.1} parent=31 // pred_check
        %p524 = pneg %p62
      $region34: #{tpu_custom_call.1} parent=31 // pred_check_branch
        %526 = sbr.rel (%p524) target = $region36
      $region35: #{tpu_custom_call.1} parent=31 // pred_region
        %s527 = smul.u32 32, %s13
        %p528 = scmp.lt.s32.totalorder %s527, 63
        %s529 = scalar_select %p528, %s527, 63
        %s530 = smul.addr %s529, 8
        %s531 = scalar_lea.vmem %s1, %s530
      $region36: #{tpu_custom_call.1} parent=31 // pred_fallthru
        _
    $region32: #{tpu_custom_call.1} parent=5 // pred_fallthru
      _
  $region6: #{tpu_custom_call.1} parent=0 // loop_footer
    %s11 = sadd.s32 1, %s7
  $region7: #{tpu_custom_call.1} parent=0 // loop_footer_branch
    %6 = sbr.rel target = $region3
  $region8: #{tpu_custom_call.1} parent=0 // loop_exit
    _

</llo_original>
